<compile_context>
chip_gen: v7x
topology: tpu7x:2x2x1
jax: 0.10.0
libtpu: 0.0.40
codegen_flags: <defaults>
</compile_context>

<pallas_src>
import functools

import jax
import jax.numpy as jnp
from jax import lax
from jax.experimental import pallas as pl
from jax.experimental.pallas import tpu as pltpu


_LANE = 128              # feature (lane) padding granularity
_SUBLANE = 8             # f32 sublane granularity for batch tiles
_MAX_UNROLLED_HIDDEN = 8 # K above this -> fori_loop instead of Python unroll


def _round_up(x, m):
    return (x + m - 1) // m * m


def _pad_axis(a, axis, target):
    pad = target - a.shape[axis]
    if pad == 0:
        return a
    widths = [(0, 0)] * a.ndim
    widths[axis] = (0, pad)
    return jnp.pad(a, widths)


@functools.lru_cache(maxsize=1)
def _pipeline_mode_supported():
    """Explicit feature probe for BlockSpec(pipeline_mode=pl.Buffered(...)).

    Replaces the old broad try/except around the whole pallas_call build: we
    only probe constructor support, so real lowering/VMEM errors surface.
    """
    try:
        pl.BlockSpec((8, 128), lambda i: (0, 0), pipeline_mode=pl.Buffered(1))
        return True
    except (AttributeError, TypeError):
        return False


def _vmem_capacity_bytes():
    # Capacity query only (for the resident-vs-streaming decision and the
    # scoped VMEM limit).  Fallback = 64 MiB, the smallest (v7x) capacity.
    try:
        return int(pltpu.get_tpu_info().vmem_capacity_bytes)
    except Exception:
        return 64 * 2**20


# ---------------------------------------------------------------------------
# Kernels
# ---------------------------------------------------------------------------

def _mlp_resident_kernel(x_ref, w_in_ref, b_in_ref, wh_ref, bh_ref,
                         w_out_ref, b_out_ref, o_ref, *, num_hidden, unroll):
    """Fused MLP forward for one batch tile; all weights VMEM-resident.

    Matmuls: bf16 operands, f32 MXU accumulation.  Bias-add / ReLU epilogue
    stays f32 on the VPU (right layout for v5e as well).  Layer ordering
    reproduces the OrderedDict 'act_0' collision: layer_0 has NO ReLU.
    """
    bf16, f32 = jnp.bfloat16, jnp.float32

    x = x_ref[...].astype(bf16)  # in-kernel cast: no XLA pre-pass over x
    h = jnp.dot(x, w_in_ref[...], preferred_element_type=f32)
    h = jnp.maximum(h + b_in_ref[...], 0.0)

    if num_hidden >= 1:
        if unroll:
            # layer_0 -- no ReLU after it (the 'act_0' key-collision quirk).
            h = jnp.dot(h.astype(bf16), wh_ref[0],
                        preferred_element_type=f32) + bh_ref[0]
            for i in range(1, num_hidden):
                h = jnp.dot(h.astype(bf16), wh_ref[i],
                            preferred_element_type=f32) + bh_ref[i]
                h = jnp.maximum(h, 0.0)
        else:
            def body(i, h):
                hn = jnp.dot(h.astype(bf16), wh_ref[i],
                             preferred_element_type=f32) + bh_ref[i]
                # ReLU for every hidden layer except layer_0.
                return jnp.where(i >= 1, jnp.maximum(hn, 0.0), hn)
            h = lax.fori_loop(0, num_hidden, body, h)

    out = jnp.dot(h.astype(bf16), w_out_ref[...],
                  preferred_element_type=f32) + b_out_ref[...]
    o_ref[...] = out.astype(o_ref.dtype)


def _mlp_stream_kernel(x_ref, w_in_ref, b_in_ref, wh_hbm, bh_hbm,
                       w_out_ref, b_out_ref, o_ref,
                       w_buf, b_buf, sem, *, num_hidden):
    """Large-H variant: hidden-layer weights stay in HBM and are streamed one
    layer ahead into a VMEM double buffer (keeps VMEM ~2*h_p*h_p*2 bytes
    regardless of K; required once the stack would not fit v7x's 64 MiB)."""
    bf16, f32 = jnp.bfloat16, jnp.float32

    def fetch(layer, slot):
        pltpu.make_async_copy(wh_hbm.at[layer], w_buf.at[slot],
                              sem.at[0, slot]).start()
        pltpu.make_async_copy(bh_hbm.at[layer], b_buf.at[slot],
                              sem.at[1, slot]).start()

    fetch(0, 0)  # prefetch layer_0 weights; hides behind the layer_in matmul

    x = x_ref[...].astype(bf16)
    h = jnp.dot(x, w_in_ref[...], preferred_element_type=f32)
    h = jnp.maximum(h + b_in_ref[...], 0.0)

    def body(i, h):
        slot = i & 1
        pltpu.make_async_copy(wh_hbm.at[0], w_buf.at[slot], sem.at[0, slot]).wait()
        pltpu.make_async_copy(bh_hbm.at[0], b_buf.at[slot], sem.at[1, slot]).wait()

        @pl.when(i + 1 < num_hidden)
        def _():
            fetch(i + 1, 1 - slot)

        hn = jnp.dot(h.astype(bf16), w_buf[slot],
                     preferred_element_type=f32) + b_buf[slot]
        # layer_0 has no ReLU (OrderedDict 'act_0' collision).
        return jnp.where(i >= 1, jnp.maximum(hn, 0.0), hn)

    h = lax.fori_loop(0, num_hidden, body, h)

    out = jnp.dot(h.astype(bf16), w_out_ref[...],
                  preferred_element_type=f32) + b_out_ref[...]
    o_ref[...] = out.astype(o_ref.dtype)


# ---------------------------------------------------------------------------
# Param prep (one-time) and forward wrapper
# ---------------------------------------------------------------------------

def prepare_dnn_params(params):
    """One-time prep: lane-pad (128) + bf16-cast the weights so no per-call
    XLA pad/convert passes (and their extra HBM round trips) are needed.

    Input layout matches the PyTorch module with W stored transposed:
      w_in (d_in,H), b_in (1,H), wh (K,H,H), bh (K,1,H), w_out (H,d_out),
      b_out (1,d_out), all float32.
    """
    w_in, b_in = params["w_in"], params["b_in"]
    wh, bh = params["wh"], params["bh"]
    w_out, b_out = params["w_out"], params["b_out"]

    d_in, H = w_in.shape
    d_out = w_out.shape[1]
    K = wh.shape[0]

    # NOTE: on v6e/v7x the MXU is 2x256x256; H in (128, 256] already rounds to
    # 256 here.  We keep 128 granularity for H <= 128 because those sizes are
    # overhead-bound, not MXU-bound (padding to 256 would 4x the matmul work).
    h_p = _round_up(H, _LANE)
    d_out_p = _round_up(d_out, _LANE)

    bf16, f32 = jnp.bfloat16, jnp.float32
    # d_in stays un-padded: the BlockSpec uses a full-extent block on that axis.
    w_in_p = _pad_axis(w_in, 1, h_p).astype(bf16)
    b_in_p = _pad_axis(b_in, 1, h_p).astype(f32)
    w_out_p = _pad_axis(_pad_axis(w_out, 0, h_p), 1, d_out_p).astype(bf16)
    b_out_p = _pad_axis(b_out, 1, d_out_p).astype(f32)
    if K >= 1:
        wh_p = _pad_axis(_pad_axis(wh, 1, h_p), 2, h_p).astype(bf16)
        bh_p = _pad_axis(bh, 2, h_p).astype(f32)
    else:
        wh_p = jnp.zeros((1, h_p, h_p), bf16)  # dummy, never read
        bh_p = jnp.zeros((1, 1, h_p), f32)

    return {"w_in": w_in_p, "b_in": b_in_p, "wh": wh_p, "bh": bh_p,
            "w_out": w_out_p, "b_out": b_out_p,
            "dims": (int(d_in), int(H), int(d_out), int(K))}


def dnn_forward(x, params, *, max_block_m=512):
    """Fused DNN forward.  `params` may be raw (see init_dnn_params) or the
    output of prepare_dnn_params (preferred: prep once, call many times)."""
    prepared = params if "dims" in params else prepare_dnn_params(params)

    w_in_p, b_in_p = prepared["w_in"], prepared["b_in"]
    wh_p, bh_p = prepared["wh"], prepared["bh"]
    w_out_p, b_out_p = prepared["w_out"], prepared["b_out"]
    d_in, H, d_out, K = prepared["dims"]

    B = x.shape[0]
    h_p = w_in_p.shape[1]
    d_out_p = w_out_p.shape[1]
    kw = wh_p.shape[0]
    f32 = jnp.float32

    # ---- batch tiling: minimize padding; >= 2 tiles so v7x's two TCs both
    # get work (grid axis is "parallel"); cheap no-op on 1-TC v5e/v6e. ----
    b8 = _round_up(B, _SUBLANE)
    n_tiles = max(pl.cdiv(b8, max_block_m), 2 if b8 >= 256 else 1)
    block_m = _round_up(pl.cdiv(b8, n_tiles), _SUBLANE)
    b_pad = block_m * n_tiles
    x_p = _pad_axis(x, 0, b_pad)  # usually a no-op; feature axis never padded

    # ---- VMEM budgeting & resident-vs-streaming decision ----
    wbuf = 1 if _pipeline_mode_supported() else 2     # weight buffer count
    weight_stack = (d_in * h_p + kw * h_p * h_p + h_p * d_out_p) * 2   # bf16
    bias_stack = (h_p + kw * h_p + d_out_p) * 4                        # f32
    resident_weight_vmem = wbuf * (weight_stack + bias_stack)

    vmem_cap = _vmem_capacity_bytes()
    use_streaming = (K >= 1) and (resident_weight_vmem > 0.6 * vmem_cap)

    tile_vmem = 2 * block_m * d_in * 4 + 2 * block_m * d_out_p * 4  # dbl-buffered x/out
    act_vmem = 3 * block_m * h_p * 4                                # f32 h + bf16 temps
    if use_streaming:
        io_weights = wbuf * ((d_in * h_p + h_p * d_out_p) * 2 + (h_p + d_out_p) * 4)
        footprint = io_weights + 2 * (h_p * h_p * 2 + h_p * 4) + tile_vmem + act_vmem
    else:
        footprint = resident_weight_vmem + tile_vmem + act_vmem
    vmem_limit = int(min(max(footprint + 4 * 2**20, 16 * 2**20), vmem_cap))

    # Advisory cost hint so XLA schedules surrounding ops around the call.
    flops = 2 * B * (d_in * H + K * H * H + H * d_out)
    bytes_accessed = int(x_p.size * x_p.dtype.itemsize
                         + weight_stack + bias_stack + b_pad * d_out_p * 4)
    cost = pl.CostEstimate(flops=int(flops), transcendentals=0,
                           bytes_accessed=bytes_accessed)

    # Grid-invariant weight blocks: single-buffer when supported.
    w_kw = {"pipeline_mode": pl.Buffered(1)} if wbuf == 1 else {}
    const2 = lambda i: (0, 0)
    const3 = lambda i: (0, 0, 0)

    if not use_streaming:
        kernel = functools.partial(_mlp_resident_kernel, num_hidden=K,
                                   unroll=(K <= _MAX_UNROLLED_HIDDEN))
        in_specs = [
            pl.BlockSpec((block_m, d_in), lambda i: (i, 0)),       # x tile (f32)
            pl.BlockSpec((d_in, h_p), const2, **w_kw),             # w_in
            pl.BlockSpec((1, h_p), const2, **w_kw),                # b_in
            pl.BlockSpec((kw, h_p, h_p), const3, **w_kw),          # hidden W stack
            pl.BlockSpec((kw, 1, h_p), const3, **w_kw),            # hidden b stack
            pl.BlockSpec((h_p, d_out_p), const2, **w_kw),          # w_out
            pl.BlockSpec((1, d_out_p), const2, **w_kw),            # b_out
        ]
        scratch = []
    else:
        kernel = functools.partial(_mlp_stream_kernel, num_hidden=K)
        in_specs = [
            pl.BlockSpec((block_m, d_in), lambda i: (i, 0)),       # x tile (f32)
            pl.BlockSpec((d_in, h_p), const2, **w_kw),             # w_in
            pl.BlockSpec((1, h_p), const2, **w_kw),                # b_in
            pl.BlockSpec(memory_space=pl.ANY),                     # hidden W in HBM
            pl.BlockSpec(memory_space=pl.ANY),                     # hidden b in HBM
            pl.BlockSpec((h_p, d_out_p), const2, **w_kw),          # w_out
            pl.BlockSpec((1, d_out_p), const2, **w_kw),            # b_out
        ]
        scratch = [
            pltpu.VMEM((2, h_p, h_p), wh_p.dtype),                 # W double buffer
            pltpu.VMEM((2, 1, h_p), bh_p.dtype),                   # b double buffer
            pltpu.SemaphoreType.DMA((2, 2)),
        ]

    grid_spec = pltpu.PrefetchScalarGridSpec(
        num_scalar_prefetch=0,
        grid=(n_tiles,),
        in_specs=in_specs,
        out_specs=pl.BlockSpec((block_m, d_out_p), lambda i: (i, 0)),
        scratch_shapes=scratch,
    )

    out = pl.pallas_call(
        kernel,
        out_shape=jax.ShapeDtypeStruct((b_pad, d_out_p), f32),
        grid_spec=grid_spec,
        compiler_params=pltpu.CompilerParams(
            dimension_semantics=("parallel",),
            vmem_limit_bytes=vmem_limit,
        ),
        cost_estimate=cost,
    )(x_p, w_in_p, b_in_p, wh_p, bh_p, w_out_p, b_out_p)

    return out[:B, :d_out]


# ---------------------------------------------------------------------------
# Init + pure-JAX reference (same layer ordering, bf16 matmul inputs)
# ---------------------------------------------------------------------------

def init_dnn_params(key, d_in, d_out, hid_arch):
    """Weights ~ kaiming_uniform (bound = sqrt(6/fan_in)); biases ~ default
    nn.Linear init.  Weights stored as (in_features, out_features) = W.T."""
    K, H = hid_arch[0], hid_arch[1]

    def linear(key, fan_in, fan_out):
        kw, kb = jax.random.split(key)
        w_bound = jnp.sqrt(6.0 / fan_in)
        b_bound = 1.0 / jnp.sqrt(fan_in)
        w = jax.random.uniform(kw, (fan_in, fan_out), jnp.float32, -w_bound, w_bound)
        b = jax.random.uniform(kb, (1, fan_out), jnp.float32, -b_bound, b_bound)
        return w, b

    keys = jax.random.split(key, K + 2)
    w_in, b_in = linear(keys[0], d_in, H)
    wh_list, bh_list = [], []
    for i in range(K):
        w, b = linear(keys[1 + i], H, H)
        wh_list.append(w)
        bh_list.append(b[None])
    w_out, b_out = linear(keys[K + 1], H, d_out)

    wh = jnp.stack(wh_list, axis=0) if K > 0 else jnp.zeros((0, H, H), jnp.float32)
    bh = jnp.concatenate(bh_list, axis=0) if K > 0 else jnp.zeros((0, 1, H), jnp.float32)
    return {"w_in": w_in, "b_in": b_in, "wh": wh, "bh": bh,
            "w_out": w_out, "b_out": b_out}


def dnn_reference(x, params):
    bf16, f32 = jnp.bfloat16, jnp.float32

    def linear(h, w, b):
        return jnp.dot(h.astype(bf16), w.astype(bf16),
                       preferred_element_type=f32) + b

    h = jnp.maximum(linear(x, params["w_in"], params["b_in"]), 0.0)
    K = params["wh"].shape[0]
    if K >= 1:
        h = linear(h, params["wh"][0], params["bh"][0])          # layer_0, no ReLU
        for i in range(1, K):
            h = jnp.maximum(linear(h, params["wh"][i], params["bh"][i]), 0.0)
    return linear(h, params["w_out"], params["b_out"])


if __name__ == "__main__":
    key = jax.random.PRNGKey(0)

    # Case 1: small shapes consistent with the module (hidden=32, 3 extra layers).
    d_in, d_out, hid_arch, B = 16, 4, (3, 32), 64
    k1, k2, key = jax.random.split(key, 3)
    x = jax.random.normal(k1, (B, d_in), dtype=jnp.float32)
    params = init_dnn_params(k2, d_in, d_out, hid_arch)
    prepared = prepare_dnn_params(params)           # one-time weight prep
    out = jax.block_until_ready(dnn_forward(x, prepared))
    ref = dnn_reference(x, params)
    assert out.shape == (B, d_out)
    # bf16 matmul inputs -> loosened tolerance vs the bf16-matched reference.
    assert jnp.allclose(out, ref, atol=5e-2, rtol=5e-2), (
        f"mismatch, max abs err = {jnp.max(jnp.abs(out - ref))}")

    # Case 2: non-aligned dims + batch split into 2 tiles (200 rows each -> no
    # batch padding; exercises the multi-tile "parallel" grid).
    d_in, d_out, hid_arch, B = 24, 10, (2, 96), 400
    k1, k2, key = jax.random.split(key, 3)
    x = jax.random.normal(k1, (B, d_in), dtype=jnp.float32)
    params = init_dnn_params(k2, d_in, d_out, hid_arch)
    prepared = prepare_dnn_params(params)
    out = jax.block_until_ready(dnn_forward(x, prepared, max_block_m=512))
    ref = dnn_reference(x, params)
    assert out.shape == (B, d_out)
    assert jnp.allclose(out, ref, atol=5e-2, rtol=5e-2), (
        f"mismatch, max abs err = {jnp.max(jnp.abs(out - ref))}")

    print("KERNEL_OK")
</pallas_src>

<mosaic_0001>
module attributes {stable_mosaic.version = 11 : i64} {
  func.func @_mlp_resident_kernel(%arg0: i32, %arg1: memref<64x16xf32, #tpu.memory_space<vmem>>, %arg2: memref<16x128xbf16, #tpu.memory_space<vmem>>, %arg3: memref<1x128xf32, #tpu.memory_space<vmem>>, %arg4: memref<3x128x128xbf16, #tpu.memory_space<vmem>>, %arg5: memref<3x1x128xf32, #tpu.memory_space<vmem>>, %arg6: memref<128x128xbf16, #tpu.memory_space<vmem>>, %arg7: memref<1x128xf32, #tpu.memory_space<vmem>>, %arg8: memref<64x128xf32, #tpu.memory_space<vmem>>) attributes {dimension_semantics = [#tpu.dimension_semantics<parallel>], iteration_bounds = array<i64: 1>, scalar_prefetch = 0 : i64, scratch_operands = 0 : i64, tpu.core_type = #tpu.core_type<tc>, window_params = [{transform_indices = @transform_0, window_bounds = array<i64: 64, 16>}, {pipeline_mode = #tpu.pipeline_mode<synchronous>, transform_indices = @transform_1, window_bounds = array<i64: 16, 128>}, {pipeline_mode = #tpu.pipeline_mode<synchronous>, transform_indices = @transform_2, window_bounds = array<i64: 1, 128>}, {pipeline_mode = #tpu.pipeline_mode<synchronous>, transform_indices = @transform_3, window_bounds = array<i64: 3, 128, 128>}, {pipeline_mode = #tpu.pipeline_mode<synchronous>, transform_indices = @transform_4, window_bounds = array<i64: 3, 1, 128>}, {pipeline_mode = #tpu.pipeline_mode<synchronous>, transform_indices = @transform_5, window_bounds = array<i64: 128, 128>}, {pipeline_mode = #tpu.pipeline_mode<synchronous>, transform_indices = @transform_6, window_bounds = array<i64: 1, 128>}, {transform_indices = @transform_7, window_bounds = array<i64: 64, 128>}]} {
    %c0 = arith.constant 0 : index
    %c0_0 = arith.constant 0 : index
    %0 = vector.load %arg1[%c0, %c0_0] : memref<64x16xf32, #tpu.memory_space<vmem>>, vector<64x16xf32>
    %1 = arith.truncf %0 : vector<64x16xf32> to vector<64x16xbf16>
    %c0_1 = arith.constant 0 : index
    %c0_2 = arith.constant 0 : index
    %2 = vector.load %arg2[%c0_1, %c0_2] : memref<16x128xbf16, #tpu.memory_space<vmem>>, vector<16x128xbf16>
    %cst = arith.constant dense<0.000000e+00> : vector<64x128xf32>
    %3 = tpu.matmul %1, %2, %cst {dimension_numbers = #tpu.dot_dimension_numbers<[1], [0], [0], [1], [0, 0, 1, 1], [], []>} : vector<64x16xbf16>, vector<16x128xbf16>, vector<64x128xf32> -> vector<64x128xf32>
    %c0_3 = arith.constant 0 : index
    %c0_4 = arith.constant 0 : index
    %4 = vector.load %arg3[%c0_3, %c0_4] : memref<1x128xf32, #tpu.memory_space<vmem>>, vector<1x128xf32>
    %5 = vector.broadcast %4 : vector<1x128xf32> to vector<64x128xf32>
    %6 = arith.addf %3, %5 : vector<64x128xf32>
    %cst_5 = arith.constant 0.000000e+00 : f32
    %7 = vector.broadcast %cst_5 : f32 to vector<64x128xf32>
    %8 = arith.maximumf %6, %7 : vector<64x128xf32>
    %9 = arith.truncf %8 : vector<64x128xf32> to vector<64x128xbf16>
    %c0_6 = arith.constant 0 : index
    %c0_7 = arith.constant 0 : index
    %c0_8 = arith.constant 0 : index
    %10 = vector.load %arg4[%c0_6, %c0_7, %c0_8] : memref<3x128x128xbf16, #tpu.memory_space<vmem>>, vector<1x128x128xbf16>
    %11 = vector.shape_cast %10 : vector<1x128x128xbf16> to vector<128x128xbf16>
    %cst_9 = arith.constant dense<0.000000e+00> : vector<64x128xf32>
    %12 = tpu.matmul %9, %11, %cst_9 {dimension_numbers = #tpu.dot_dimension_numbers<[1], [0], [0], [1], [0, 0, 1, 1], [], []>} : vector<64x128xbf16>, vector<128x128xbf16>, vector<64x128xf32> -> vector<64x128xf32>
    %c0_10 = arith.constant 0 : index
    %c0_11 = arith.constant 0 : index
    %c0_12 = arith.constant 0 : index
    %13 = vector.load %arg5[%c0_10, %c0_11, %c0_12] : memref<3x1x128xf32, #tpu.memory_space<vmem>>, vector<1x1x128xf32>
    %14 = vector.shape_cast %13 : vector<1x1x128xf32> to vector<1x128xf32>
    %15 = vector.broadcast %14 : vector<1x128xf32> to vector<64x128xf32>
    %16 = arith.addf %12, %15 : vector<64x128xf32>
    %17 = arith.truncf %16 : vector<64x128xf32> to vector<64x128xbf16>
    %c1 = arith.constant 1 : index
    %c0_13 = arith.constant 0 : index
    %c0_14 = arith.constant 0 : index
    %18 = vector.load %arg4[%c1, %c0_13, %c0_14] : memref<3x128x128xbf16, #tpu.memory_space<vmem>>, vector<1x128x128xbf16>
    %19 = vector.shape_cast %18 : vector<1x128x128xbf16> to vector<128x128xbf16>
    %cst_15 = arith.constant dense<0.000000e+00> : vector<64x128xf32>
    %20 = tpu.matmul %17, %19, %cst_15 {dimension_numbers = #tpu.dot_dimension_numbers<[1], [0], [0], [1], [0, 0, 1, 1], [], []>} : vector<64x128xbf16>, vector<128x128xbf16>, vector<64x128xf32> -> vector<64x128xf32>
    %c1_16 = arith.constant 1 : index
    %c0_17 = arith.constant 0 : index
    %c0_18 = arith.constant 0 : index
    %21 = vector.load %arg5[%c1_16, %c0_17, %c0_18] : memref<3x1x128xf32, #tpu.memory_space<vmem>>, vector<1x1x128xf32>
    %22 = vector.shape_cast %21 : vector<1x1x128xf32> to vector<1x128xf32>
    %23 = vector.broadcast %22 : vector<1x128xf32> to vector<64x128xf32>
    %24 = arith.addf %20, %23 : vector<64x128xf32>
    %cst_19 = arith.constant 0.000000e+00 : f32
    %25 = vector.broadcast %cst_19 : f32 to vector<64x128xf32>
    %26 = arith.maximumf %24, %25 : vector<64x128xf32>
    %27 = arith.truncf %26 : vector<64x128xf32> to vector<64x128xbf16>
    %c2 = arith.constant 2 : index
    %c0_20 = arith.constant 0 : index
    %c0_21 = arith.constant 0 : index
    %28 = vector.load %arg4[%c2, %c0_20, %c0_21] : memref<3x128x128xbf16, #tpu.memory_space<vmem>>, vector<1x128x128xbf16>
    %29 = vector.shape_cast %28 : vector<1x128x128xbf16> to vector<128x128xbf16>
    %cst_22 = arith.constant dense<0.000000e+00> : vector<64x128xf32>
    %30 = tpu.matmul %27, %29, %cst_22 {dimension_numbers = #tpu.dot_dimension_numbers<[1], [0], [0], [1], [0, 0, 1, 1], [], []>} : vector<64x128xbf16>, vector<128x128xbf16>, vector<64x128xf32> -> vector<64x128xf32>
    %c2_23 = arith.constant 2 : index
    %c0_24 = arith.constant 0 : index
    %c0_25 = arith.constant 0 : index
    %31 = vector.load %arg5[%c2_23, %c0_24, %c0_25] : memref<3x1x128xf32, #tpu.memory_space<vmem>>, vector<1x1x128xf32>
    %32 = vector.shape_cast %31 : vector<1x1x128xf32> to vector<1x128xf32>
    %33 = vector.broadcast %32 : vector<1x128xf32> to vector<64x128xf32>
    %34 = arith.addf %30, %33 : vector<64x128xf32>
    %cst_26 = arith.constant 0.000000e+00 : f32
    %35 = vector.broadcast %cst_26 : f32 to vector<64x128xf32>
    %36 = arith.maximumf %34, %35 : vector<64x128xf32>
    %37 = arith.truncf %36 : vector<64x128xf32> to vector<64x128xbf16>
    %c0_27 = arith.constant 0 : index
    %c0_28 = arith.constant 0 : index
    %38 = vector.load %arg6[%c0_27, %c0_28] : memref<128x128xbf16, #tpu.memory_space<vmem>>, vector<128x128xbf16>
    %cst_29 = arith.constant dense<0.000000e+00> : vector<64x128xf32>
    %39 = tpu.matmul %37, %38, %cst_29 {dimension_numbers = #tpu.dot_dimension_numbers<[1], [0], [0], [1], [0, 0, 1, 1], [], []>} : vector<64x128xbf16>, vector<128x128xbf16>, vector<64x128xf32> -> vector<64x128xf32>
    %c0_30 = arith.constant 0 : index
    %c0_31 = arith.constant 0 : index
    %40 = vector.load %arg7[%c0_30, %c0_31] : memref<1x128xf32, #tpu.memory_space<vmem>>, vector<1x128xf32>
    %41 = vector.broadcast %40 : vector<1x128xf32> to vector<64x128xf32>
    %42 = arith.addf %39, %41 : vector<64x128xf32>
    %c0_32 = arith.constant 0 : index
    %c0_33 = arith.constant 0 : index
    %43 = vector.load %arg8[%c0_32, %c0_33] : memref<64x128xf32, #tpu.memory_space<vmem>>, vector<64x128xf32>
    tpu.vector_store %arg8[%c0_32, %c0_33], %42 {strides = array<i32>} : memref<64x128xf32, #tpu.memory_space<vmem>>, vector<64x128xf32>,
    return
  }
  func.func @transform_0(%arg0: i32) -> (i32, i32) {
    %c0_i32 = arith.constant 0 : i32
    %c0_i32_0 = arith.constant 0 : i32
    return %arg0, %c0_i32 : i32, i32
  }
  func.func @transform_1(%arg0: i32) -> (i32, i32) {
    %c0_i32 = arith.constant 0 : i32
    %c0_i32_0 = arith.constant 0 : i32
    %c0_i32_1 = arith.constant 0 : i32
    return %c0_i32, %c0_i32_0 : i32, i32
  }
  func.func @transform_2(%arg0: i32) -> (i32, i32) {
    %c0_i32 = arith.constant 0 : i32
    %c0_i32_0 = arith.constant 0 : i32
    %c0_i32_1 = arith.constant 0 : i32
    return %c0_i32, %c0_i32_0 : i32, i32
  }
  func.func @transform_3(%arg0: i32) -> (i32, i32, i32) {
    %c0_i32 = arith.constant 0 : i32
    %c0_i32_0 = arith.constant 0 : i32
    %c0_i32_1 = arith.constant 0 : i32
    %c0_i32_2 = arith.constant 0 : i32
    return %c0_i32, %c0_i32_0, %c0_i32_1 : i32, i32, i32
  }
  func.func @transform_4(%arg0: i32) -> (i32, i32, i32) {
    %c0_i32 = arith.constant 0 : i32
    %c0_i32_0 = arith.constant 0 : i32
    %c0_i32_1 = arith.constant 0 : i32
    %c0_i32_2 = arith.constant 0 : i32
    return %c0_i32, %c0_i32_0, %c0_i32_1 : i32, i32, i32
  }
  func.func @transform_5(%arg0: i32) -> (i32, i32) {
    %c0_i32 = arith.constant 0 : i32
    %c0_i32_0 = arith.constant 0 : i32
    %c0_i32_1 = arith.constant 0 : i32
    return %c0_i32, %c0_i32_0 : i32, i32
  }
  func.func @transform_6(%arg0: i32) -> (i32, i32) {
    %c0_i32 = arith.constant 0 : i32
    %c0_i32_0 = arith.constant 0 : i32
    %c0_i32_1 = arith.constant 0 : i32
    return %c0_i32, %c0_i32_0 : i32, i32
  }
  func.func @transform_7(%arg0: i32) -> (i32, i32) {
    %c0_i32 = arith.constant 0 : i32
    %c0_i32_0 = arith.constant 0 : i32
    return %arg0, %c0_i32 : i32, i32
  }
}

</mosaic_0001>

<llo_original>
// kernel: tpu_custom_call.1
$region0: #{tpu_custom_call.1}
  #allocation0 [shape = 'u32[]', space=smem, size = 0x4, offset = 0x4, fixed_abs, tag = 'smem constant byte address 0x4 - core index']
  #allocation1 [shape = 'u32[144,128]{1,0:T(1,128)}', space=vmem, size = 0x12000, scoped, tag = 'internal scratch']
  %s0 = inlined_call_operand.vmem [shape: f32[64,16], index: 0, kind: input, shape index: {}]
  %s1 = inlined_call_operand.vmem [shape: bf16[16,128], index: 1, kind: input, shape index: {}]
  %s2 = inlined_call_operand.vmem [shape: f32[1,128], index: 2, kind: input, shape index: {}]
  %s3 = inlined_call_operand.hbm [shape: bf16[3,128,128], index: 3, kind: input, shape index: {}]
  %s4 = inlined_call_operand.vmem [shape: f32[3,1,128], index: 4, kind: input, shape index: {}]
  %s5 = inlined_call_operand.vmem [shape: bf16[128,128], index: 5, kind: input, shape index: {}]
  %s6 = inlined_call_operand.vmem [shape: f32[1,128], index: 6, kind: input, shape index: {}]
  %s7 = inlined_call_operand.hbm [shape: f32[64,128], index: 7, kind: output, shape index: {}]
  %s8 = sld [smem:[#allocation0]]
  $region42: #{tpu_custom_call.1} parent=0
    _
  %s10 = ssub.s32 1, %s8
  %s11 = scalar_select 0, %s10, %s8
  $region1: #{tpu_custom_call.1} parent=0
    #allocation2 [shape = 'u8[98304]{0}', space=vmem, size = 0x18000, scoped, tag = 'input window, operand 3, single buffered']
    #allocation3 [shape = 's32[1]{0}', space=sflag, size = 0x4, scoped, tag = 'scoped memory for tpu_custom_call.1']
    #allocation4 [shape = 's32[1]{0}', space=sflag, size = 0x4, scoped, tag = 'scoped memory for tpu_custom_call.1']
    #allocation5 [shape = 'u8[32768]{0}', space=vmem, size = 0x8000, scoped, tag = 'output window, operand 0, single buffered']
    %12 = vsyncpa [#allocation3], 0
    %13 = vsyncpa [#allocation4], 0
    // Predicated region
    $region2: #{tpu_custom_call.1} parent=1 // pred_check
      _
    $region3: #{tpu_custom_call.1} parent=1 // pred_check_branch
      %15 = sbr.rel (0) target = $region5
    $region4: #{tpu_custom_call.1} parent=1 // pred_region
      _
    $region5: #{tpu_custom_call.1} parent=1 // pred_fallthru
      _
    // Predicated region
    $region6: #{tpu_custom_call.1} parent=1 // pred_check
      _
    $region7: #{tpu_custom_call.1} parent=1 // pred_check_branch
      %17 = sbr.rel (0) target = $region9
    $region8: #{tpu_custom_call.1} parent=1 // pred_region
      _
    $region9: #{tpu_custom_call.1} parent=1 // pred_fallthru
      _
    // Predicated region
    $region10: #{tpu_custom_call.1} parent=1 // pred_check
      _
    $region11: #{tpu_custom_call.1} parent=1 // pred_check_branch
      %19 = sbr.rel (0) target = $region13
    $region12: #{tpu_custom_call.1} parent=1 // pred_region
      _
    $region13: #{tpu_custom_call.1} parent=1 // pred_fallthru
      _
    // Predicated region
    $region14: #{tpu_custom_call.1} parent=1 // pred_check
      _
    $region15: #{tpu_custom_call.1} parent=1 // pred_check_branch
      %21 = sbr.rel (0) target = $region17
    $region16: #{tpu_custom_call.1} parent=1 // pred_region
      %s23 = ssub.s32 3072, 3072
      %24 = vsyncadd [#allocation3], %s23
      %s25 = sshll.u32 [#allocation2], 4
      %s26 = int_to_ptr.vmem [resolvable:$true] %s25
      %31 = dma.hbm_to_vmem [thread:$0]  %s3, 3072, %s26, [#allocation3], 64, 64, 4
    $region17: #{tpu_custom_call.1} parent=1 // pred_fallthru
      _
    // Predicated region
    $region18: #{tpu_custom_call.1} parent=1 // pred_check
      _
    $region19: #{tpu_custom_call.1} parent=1 // pred_check_branch
      %33 = sbr.rel (0) target = $region21
    $region20: #{tpu_custom_call.1} parent=1 // pred_region
      _
    $region21: #{tpu_custom_call.1} parent=1 // pred_fallthru
      _
    // Predicated region
    $region22: #{tpu_custom_call.1} parent=1 // pred_check
      _
    $region23: #{tpu_custom_call.1} parent=1 // pred_check_branch
      %35 = sbr.rel (0) target = $region25
    $region24: #{tpu_custom_call.1} parent=1 // pred_region
      _
    $region25: #{tpu_custom_call.1} parent=1 // pred_fallthru
      _
    // Predicated region
    $region26: #{tpu_custom_call.1} parent=1 // pred_check
      _
    $region27: #{tpu_custom_call.1} parent=1 // pred_check_branch
      %37 = sbr.rel (0) target = $region29
    $region28: #{tpu_custom_call.1} parent=1 // pred_region
      _
    $region29: #{tpu_custom_call.1} parent=1 // pred_fallthru
      _
    // Predicated region
    $region30: #{tpu_custom_call.1} parent=1 // pred_check
      _
    $region31: #{tpu_custom_call.1} parent=1 // pred_check_branch
      %39 = sbr.rel (0) target = $region33
    $region32: #{tpu_custom_call.1} parent=1 // pred_region
      %40 = dma.done [#allocation3], 3072
    $region33: #{tpu_custom_call.1} parent=1 // pred_fallthru
      _
    %v42 = vld [vmem:[%s0] sm:$0xff]
    %v43 = vld [vmem:[%s0 + $0x8] sm:$0xff]
    %v44 = vld [vmem:[%s0 + $0x10] sm:$0xff]
    %v45 = vld [vmem:[%s0 + $0x18] sm:$0xff]
    %v46 = vld [vmem:[%s0 + $0x20] sm:$0xff]
    %v47 = vld [vmem:[%s0 + $0x28] sm:$0xff]
    %v48 = vld [vmem:[%s0 + $0x30] sm:$0xff]
    %v49 = vld [vmem:[%s0 + $0x38] sm:$0xff]
    %v50 = vpack.c.bf16 %v43, %v42
    %v51 = vpack.c.bf16 %v45, %v44
    %v52 = vpack.c.bf16 %v47, %v46
    %v53 = vpack.c.bf16 %v49, %v48
    %v54 = vld [vmem:[%s1] sm:$0xf]
    %v55 = vld [vmem:[%s1 + $0x4] sm:$0xf]
    %v56 = vld [vmem:[%s2] sm:$0x1]
    %v58 = vlaneseq
    %v59 = vshrl.u32 %v58, 7
    %v60 = vsub.s32 0, %v59
    %v61 = vrot.slane %v56, %v60
    %v65 = vunpack.c.l.b16 %v54
    %v66 = vunpack.c.l.b16 %v55
    %v67 = vpack.c.b16 %v66, %v65
    %vm69 = vcmask 130048
    %v71 = vsel %vm69, %v50, 0
    %v74 = vsel %vm69, %v51, 0
    %v77 = vsel %vm69, %v52, 0
    %v80 = vsel %vm69, %v53, 0
    %82 = vmatprep.subr.bf16.mxu0 0
    %83 = vmatpush1.bf16.msra.mxu0 %v67
    %84 = vmatprep.subr.bf16.mxu0 0
    %85 = vmatpush1.bf16.msra.mxu0 0
    %86 = vmatprep.subr.bf16.mxu0 0
    %87 = vmatpush1.bf16.msra.mxu0 0
    %88 = vmatprep.subr.bf16.mxu0 0
    %89 = vmatpush1.bf16.msra.mxu0 0
    %90 = vmatprep.subr.bf16.mxu0 0
    %91 = vmatpush1.bf16.msra.mxu0 0
    %92 = vmatprep.subr.bf16.mxu0 0
    %93 = vmatpush1.bf16.msra.mxu0 0
    %94 = vmatprep.subr.bf16.mxu0 0
    %95 = vmatpush1.bf16.msra.mxu0 0
    %96 = vmatprep.subr.bf16.mxu0 0
    %97 = vmatpush1.bf16.msra.mxu0 0
    %98 = vmatprep.subr.bf16.mxu0 0
    %99 = vmatpush1.bf16.msra.mxu0 0
    %100 = vmatprep.subr.bf16.mxu0 0
    %101 = vmatpush1.bf16.msra.mxu0 0
    %102 = vmatprep.subr.bf16.mxu0 0
    %103 = vmatpush1.bf16.msra.mxu0 0
    %104 = vmatprep.subr.bf16.mxu0 0
    %105 = vmatpush1.bf16.msra.mxu0 0
    %106 = vmatprep.subr.bf16.mxu0 0
    %107 = vmatpush1.bf16.msra.mxu0 0
    %108 = vmatprep.subr.bf16.mxu0 0
    %109 = vmatpush1.bf16.msra.mxu0 0
    %110 = vmatprep.subr.bf16.mxu0 0
    %111 = vmatpush1.bf16.msra.mxu0 0
    %112 = vmatprep.subr.bf16.mxu0 0
    %113 = vmatpush1.bf16.msra.mxu0 0
    %114 = vmatprep.mubr.bf16.mxu0 0
    %115 = vmatmul.mubr.bf16.gmra.mrb[0].mxu0 %v71
    %v116 = vpop.f32.mrb[0].mxu0
    %v117 = vadd.f32 %v61, %v116
    %v118 = vpop.f32.mrb[0].mxu0
    %v119 = vpop.f32.mrb[0].mxu0
    %v120 = vadd.f32 %v61, %v119
    %v121 = vpop.f32.mrb[0].mxu0
    %122 = vmatprep.mubr.bf16.mxu0 0
    %123 = vmatmul.mubr.bf16.gmra.mrb[0].mxu0 %v74
    %v124 = vpop.f32.mrb[0].mxu0
    %v125 = vadd.f32 %v61, %v124
    %v126 = vpop.f32.mrb[0].mxu0
    %v127 = vpop.f32.mrb[0].mxu0
    %v128 = vadd.f32 %v61, %v127
    %v129 = vpop.f32.mrb[0].mxu0
    %130 = vmatprep.mubr.bf16.mxu0 0
    %131 = vmatmul.mubr.bf16.gmra.mrb[0].mxu0 %v77
    %v132 = vpop.f32.mrb[0].mxu0
    %v133 = vadd.f32 %v61, %v132
    %v134 = vpop.f32.mrb[0].mxu0
    %v135 = vpop.f32.mrb[0].mxu0
    %v136 = vadd.f32 %v61, %v135
    %v137 = vpop.f32.mrb[0].mxu0
    %138 = vmatprep.mubr.bf16.mxu0 0
    %139 = vmatmul.mubr.bf16.gmra.mrb[0].mxu0 %v80
    %v140 = vpop.f32.mrb[0].mxu0
    %v141 = vadd.f32 %v61, %v140
    %v142 = vpop.f32.mrb[0].mxu0
    %v143 = vpop.f32.mrb[0].mxu0
    %v144 = vadd.f32 %v61, %v143
    %v145 = vpop.f32.mrb[0].mxu0
    %146 = vdwg.mxu0
    %v147 = vmax.f32 %v117, 0.0
    %v148 = vmax.f32 %v120, 0.0
    %v149 = vmax.f32 %v125, 0.0
    %v150 = vmax.f32 %v128, 0.0
    %v151 = vmax.f32 %v133, 0.0
    %v152 = vmax.f32 %v136, 0.0
    %v153 = vmax.f32 %v141, 0.0
    %v154 = vmax.f32 %v144, 0.0
    %v155 = vpack.c.bf16 %v148, %v147
    %v156 = vpack.c.bf16 %v150, %v149
    %v157 = vpack.c.bf16 %v152, %v151
    %v158 = vpack.c.bf16 %v154, %v153
    %v159 = vld [vmem:[#allocation2] sm:$0xf]
    %v160 = vld [vmem:[#allocation2 + $0x4] sm:$0xf]
    %v161 = vld [vmem:[#allocation2 + $0x8] sm:$0xf]
    %v162 = vld [vmem:[#allocation2 + $0xc] sm:$0xf]
    %v163 = vld [vmem:[#allocation2 + $0x10] sm:$0xf]
    %v164 = vld [vmem:[#allocation2 + $0x14] sm:$0xf]
    %v165 = vld [vmem:[#allocation2 + $0x18] sm:$0xf]
    %v166 = vld [vmem:[#allocation2 + $0x1c] sm:$0xf]
    %v167 = vld [vmem:[#allocation2 + $0x20] sm:$0xf]
    %v168 = vld [vmem:[#allocation2 + $0x24] sm:$0xf]
    %v169 = vld [vmem:[#allocation2 + $0x28] sm:$0xf]
    %v170 = vld [vmem:[#allocation2 + $0x2c] sm:$0xf]
    %v171 = vld [vmem:[#allocation2 + $0x30] sm:$0xf]
    %v172 = vld [vmem:[#allocation2 + $0x34] sm:$0xf]
    %v173 = vld [vmem:[#allocation2 + $0x38] sm:$0xf]
    %v174 = vld [vmem:[#allocation2 + $0x3c] sm:$0xf]
    %v175 = vld [vmem:[%s4] sm:$0x1]
    %v177 = vlaneseq
    %v178 = vshrl.u32 %v177, 7
    %v179 = vsub.s32 0, %v178
    %v180 = vrot.slane %v175, %v179
    %v198 = vunpack.c.l.b16 %v159
    %v199 = vunpack.c.l.b16 %v160
    %v200 = vunpack.c.l.b16 %v161
    %v201 = vunpack.c.l.b16 %v162
    %v202 = vunpack.c.l.b16 %v163
    %v203 = vunpack.c.l.b16 %v164
    %v204 = vunpack.c.l.b16 %v165
    %v205 = vunpack.c.l.b16 %v166
    %v206 = vunpack.c.l.b16 %v167
    %v207 = vunpack.c.l.b16 %v168
    %v208 = vunpack.c.l.b16 %v169
    %v209 = vunpack.c.l.b16 %v170
    %v210 = vunpack.c.l.b16 %v171
    %v211 = vunpack.c.l.b16 %v172
    %v212 = vunpack.c.l.b16 %v173
    %v213 = vunpack.c.l.b16 %v174
    %v214 = vpack.c.b16 %v199, %v198
    %v215 = vpack.c.b16 %v201, %v200
    %v216 = vpack.c.b16 %v203, %v202
    %v217 = vpack.c.b16 %v205, %v204
    %v218 = vpack.c.b16 %v207, %v206
    %v219 = vpack.c.b16 %v209, %v208
    %v220 = vpack.c.b16 %v211, %v210
    %v221 = vpack.c.b16 %v213, %v212
    %230 = vmatprep.subr.bf16.mxu0 0
    %231 = vmatpush1.bf16.msra.mxu0 %v214
    %232 = vmatprep.subr.bf16.mxu0 0
    %233 = vmatpush1.bf16.msra.mxu0 %v215
    %234 = vmatprep.subr.bf16.mxu0 0
    %235 = vmatpush1.bf16.msra.mxu0 %v216
    %236 = vmatprep.subr.bf16.mxu0 0
    %237 = vmatpush1.bf16.msra.mxu0 %v217
    %238 = vmatprep.subr.bf16.mxu0 0
    %239 = vmatpush1.bf16.msra.mxu0 %v218
    %240 = vmatprep.subr.bf16.mxu0 0
    %241 = vmatpush1.bf16.msra.mxu0 %v219
    %242 = vmatprep.subr.bf16.mxu0 0
    %243 = vmatpush1.bf16.msra.mxu0 %v220
    %244 = vmatprep.subr.bf16.mxu0 0
    %245 = vmatpush1.bf16.msra.mxu0 %v221
    %246 = vmatprep.subr.bf16.mxu0 0
    %247 = vmatpush1.bf16.msra.mxu0 0
    %248 = vmatprep.subr.bf16.mxu0 0
    %249 = vmatpush1.bf16.msra.mxu0 0
    %250 = vmatprep.subr.bf16.mxu0 0
    %251 = vmatpush1.bf16.msra.mxu0 0
    %252 = vmatprep.subr.bf16.mxu0 0
    %253 = vmatpush1.bf16.msra.mxu0 0
    %254 = vmatprep.subr.bf16.mxu0 0
    %255 = vmatpush1.bf16.msra.mxu0 0
    %256 = vmatprep.subr.bf16.mxu0 0
    %257 = vmatpush1.bf16.msra.mxu0 0
    %258 = vmatprep.subr.bf16.mxu0 0
    %259 = vmatpush1.bf16.msra.mxu0 0
    %260 = vmatprep.subr.bf16.mxu0 0
    %261 = vmatpush1.bf16.msra.mxu0 0
    %262 = vmatprep.mubr.bf16.mxu0 0
    %263 = vmatmul.mubr.bf16.gmra.mrb[0].mxu0 %v155
    %v264 = vpop.f32.mrb[0].mxu0
    %v265 = vadd.f32 %v180, %v264
    %v266 = vpop.f32.mrb[0].mxu0
    %v267 = vpop.f32.mrb[0].mxu0
    %v268 = vadd.f32 %v180, %v267
    %v269 = vpop.f32.mrb[0].mxu0
    %270 = vmatprep.mubr.bf16.mxu0 0
    %271 = vmatmul.mubr.bf16.gmra.mrb[0].mxu0 %v156
    %v272 = vpop.f32.mrb[0].mxu0
    %v273 = vadd.f32 %v180, %v272
    %v274 = vpop.f32.mrb[0].mxu0
    %v275 = vpop.f32.mrb[0].mxu0
    %v276 = vadd.f32 %v180, %v275
    %v277 = vpop.f32.mrb[0].mxu0
    %278 = vmatprep.mubr.bf16.mxu0 0
    %279 = vmatmul.mubr.bf16.gmra.mrb[0].mxu0 %v157
    %v280 = vpop.f32.mrb[0].mxu0
    %v281 = vadd.f32 %v180, %v280
    %v282 = vpop.f32.mrb[0].mxu0
    %v283 = vpop.f32.mrb[0].mxu0
    %v284 = vadd.f32 %v180, %v283
    %v285 = vpop.f32.mrb[0].mxu0
    %286 = vmatprep.mubr.bf16.mxu0 0
    %287 = vmatmul.mubr.bf16.gmra.mrb[0].mxu0 %v158
    %v288 = vpop.f32.mrb[0].mxu0
    %v289 = vadd.f32 %v180, %v288
    %v290 = vpop.f32.mrb[0].mxu0
    %v291 = vpop.f32.mrb[0].mxu0
    %v292 = vadd.f32 %v180, %v291
    %v293 = vpop.f32.mrb[0].mxu0
    %294 = vdwg.mxu0
    %v295 = vpack.c.bf16 %v268, %v265
    %v296 = vpack.c.bf16 %v276, %v273
    %v297 = vpack.c.bf16 %v284, %v281
    %v298 = vpack.c.bf16 %v292, %v289
    %s299 = scalar_lea.vmem [#allocation2], 64
    %v300 = vld [vmem:[%s299] sm:$0xf]
    %v301 = vld [vmem:[%s299 + $0x4] sm:$0xf]
    %v302 = vld [vmem:[%s299 + $0x8] sm:$0xf]
    %v303 = vld [vmem:[%s299 + $0xc] sm:$0xf]
    %v304 = vld [vmem:[%s299 + $0x10] sm:$0xf]
    %v305 = vld [vmem:[%s299 + $0x14] sm:$0xf]
    %v306 = vld [vmem:[%s299 + $0x18] sm:$0xf]
    %v307 = vld [vmem:[%s299 + $0x1c] sm:$0xf]
    %v308 = vld [vmem:[%s299 + $0x20] sm:$0xf]
    %v309 = vld [vmem:[%s299 + $0x24] sm:$0xf]
    %v310 = vld [vmem:[%s299 + $0x28] sm:$0xf]
    %v311 = vld [vmem:[%s299 + $0x2c] sm:$0xf]
    %v312 = vld [vmem:[%s299 + $0x30] sm:$0xf]
    %v313 = vld [vmem:[%s299 + $0x34] sm:$0xf]
    %v314 = vld [vmem:[%s299 + $0x38] sm:$0xf]
    %v315 = vld [vmem:[%s299 + $0x3c] sm:$0xf]
    %s316 = scalar_lea.vmem %s4, 1
    %v317 = vld [vmem:[%s316] sm:$0x1]
    %v319 = vlaneseq
    %v320 = vshrl.u32 %v319, 7
    %v321 = vsub.s32 0, %v320
    %v322 = vrot.slane %v317, %v321
    %v340 = vunpack.c.l.b16 %v300
    %v341 = vunpack.c.l.b16 %v301
    %v342 = vunpack.c.l.b16 %v302
    %v343 = vunpack.c.l.b16 %v303
    %v344 = vunpack.c.l.b16 %v304
    %v345 = vunpack.c.l.b16 %v305
    %v346 = vunpack.c.l.b16 %v306
    %v347 = vunpack.c.l.b16 %v307
    %v348 = vunpack.c.l.b16 %v308
    %v349 = vunpack.c.l.b16 %v309
    %v350 = vunpack.c.l.b16 %v310
    %v351 = vunpack.c.l.b16 %v311
    %v352 = vunpack.c.l.b16 %v312
    %v353 = vunpack.c.l.b16 %v313
    %v354 = vunpack.c.l.b16 %v314
    %v355 = vunpack.c.l.b16 %v315
    %v356 = vpack.c.b16 %v341, %v340
    %v357 = vpack.c.b16 %v343, %v342
    %v358 = vpack.c.b16 %v345, %v344
    %v359 = vpack.c.b16 %v347, %v346
    %v360 = vpack.c.b16 %v349, %v348
    %v361 = vpack.c.b16 %v351, %v350
    %v362 = vpack.c.b16 %v353, %v352
    %v363 = vpack.c.b16 %v355, %v354
    %372 = vmatprep.subr.bf16.mxu0 0
    %373 = vmatpush1.bf16.msra.mxu0 %v356
    %374 = vmatprep.subr.bf16.mxu0 0
    %375 = vmatpush1.bf16.msra.mxu0 %v357
    %376 = vmatprep.subr.bf16.mxu0 0
    %377 = vmatpush1.bf16.msra.mxu0 %v358
    %378 = vmatprep.subr.bf16.mxu0 0
    %379 = vmatpush1.bf16.msra.mxu0 %v359
    %380 = vmatprep.subr.bf16.mxu0 0
    %381 = vmatpush1.bf16.msra.mxu0 %v360
    %382 = vmatprep.subr.bf16.mxu0 0
    %383 = vmatpush1.bf16.msra.mxu0 %v361
    %384 = vmatprep.subr.bf16.mxu0 0
    %385 = vmatpush1.bf16.msra.mxu0 %v362
    %386 = vmatprep.subr.bf16.mxu0 0
    %387 = vmatpush1.bf16.msra.mxu0 %v363
    %388 = vmatprep.subr.bf16.mxu0 0
    %389 = vmatpush1.bf16.msra.mxu0 0
    %390 = vmatprep.subr.bf16.mxu0 0
    %391 = vmatpush1.bf16.msra.mxu0 0
    %392 = vmatprep.subr.bf16.mxu0 0
    %393 = vmatpush1.bf16.msra.mxu0 0
    %394 = vmatprep.subr.bf16.mxu0 0
    %395 = vmatpush1.bf16.msra.mxu0 0
    %396 = vmatprep.subr.bf16.mxu0 0
    %397 = vmatpush1.bf16.msra.mxu0 0
    %398 = vmatprep.subr.bf16.mxu0 0
    %399 = vmatpush1.bf16.msra.mxu0 0
    %400 = vmatprep.subr.bf16.mxu0 0
    %401 = vmatpush1.bf16.msra.mxu0 0
    %402 = vmatprep.subr.bf16.mxu0 0
    %403 = vmatpush1.bf16.msra.mxu0 0
    %404 = vmatprep.mubr.bf16.mxu0 0
    %405 = vmatmul.mubr.bf16.gmra.mrb[0].mxu0 %v295
    %v406 = vpop.f32.mrb[0].mxu0
    %v407 = vadd.f32 %v322, %v406
    %v408 = vpop.f32.mrb[0].mxu0
    %v409 = vpop.f32.mrb[0].mxu0
    %v410 = vadd.f32 %v322, %v409
    %v411 = vpop.f32.mrb[0].mxu0
    %412 = vmatprep.mubr.bf16.mxu0 0
    %413 = vmatmul.mubr.bf16.gmra.mrb[0].mxu0 %v296
    %v414 = vpop.f32.mrb[0].mxu0
    %v415 = vadd.f32 %v322, %v414
    %v416 = vpop.f32.mrb[0].mxu0
    %v417 = vpop.f32.mrb[0].mxu0
    %v418 = vadd.f32 %v322, %v417
    %v419 = vpop.f32.mrb[0].mxu0
    %420 = vmatprep.mubr.bf16.mxu0 0
    %421 = vmatmul.mubr.bf16.gmra.mrb[0].mxu0 %v297
    %v422 = vpop.f32.mrb[0].mxu0
    %v423 = vadd.f32 %v322, %v422
    %v424 = vpop.f32.mrb[0].mxu0
    %v425 = vpop.f32.mrb[0].mxu0
    %v426 = vadd.f32 %v322, %v425
    %v427 = vpop.f32.mrb[0].mxu0
    %428 = vmatprep.mubr.bf16.mxu0 0
    %429 = vmatmul.mubr.bf16.gmra.mrb[0].mxu0 %v298
    %v430 = vpop.f32.mrb[0].mxu0
    %v431 = vadd.f32 %v322, %v430
    %v432 = vpop.f32.mrb[0].mxu0
    %v433 = vpop.f32.mrb[0].mxu0
    %v434 = vadd.f32 %v322, %v433
    %v435 = vpop.f32.mrb[0].mxu0
    %436 = vdwg.mxu0
    %v437 = vmax.f32 %v407, 0.0
    %v438 = vmax.f32 %v410, 0.0
    %v439 = vmax.f32 %v415, 0.0
    %v440 = vmax.f32 %v418, 0.0
    %v441 = vmax.f32 %v423, 0.0
    %v442 = vmax.f32 %v426, 0.0
    %v443 = vmax.f32 %v431, 0.0
    %v444 = vmax.f32 %v434, 0.0
    %v445 = vpack.c.bf16 %v438, %v437
    %v446 = vpack.c.bf16 %v440, %v439
    %v447 = vpack.c.bf16 %v442, %v441
    %v448 = vpack.c.bf16 %v444, %v443
    %s449 = scalar_lea.vmem [#allocation2], 128
    %v450 = vld [vmem:[%s449] sm:$0xf]
    %v451 = vld [vmem:[%s449 + $0x4] sm:$0xf]
    %v452 = vld [vmem:[%s449 + $0x8] sm:$0xf]
    %v453 = vld [vmem:[%s449 + $0xc] sm:$0xf]
    %v454 = vld [vmem:[%s449 + $0x10] sm:$0xf]
    %v455 = vld [vmem:[%s449 + $0x14] sm:$0xf]
    %v456 = vld [vmem:[%s449 + $0x18] sm:$0xf]
    %v457 = vld [vmem:[%s449 + $0x1c] sm:$0xf]
    %v458 = vld [vmem:[%s449 + $0x20] sm:$0xf]
    %v459 = vld [vmem:[%s449 + $0x24] sm:$0xf]
    %v460 = vld [vmem:[%s449 + $0x28] sm:$0xf]
    %v461 = vld [vmem:[%s449 + $0x2c] sm:$0xf]
    %v462 = vld [vmem:[%s449 + $0x30] sm:$0xf]
    %v463 = vld [vmem:[%s449 + $0x34] sm:$0xf]
    %v464 = vld [vmem:[%s449 + $0x38] sm:$0xf]
    %v465 = vld [vmem:[%s449 + $0x3c] sm:$0xf]
    %s466 = scalar_lea.vmem %s4, 2
    %v467 = vld [vmem:[%s466] sm:$0x1]
    %v469 = vlaneseq
    %v470 = vshrl.u32 %v469, 7
    %v471 = vsub.s32 0, %v470
    %v472 = vrot.slane %v467, %v471
    %v490 = vunpack.c.l.b16 %v450
    %v491 = vunpack.c.l.b16 %v451
    %v492 = vunpack.c.l.b16 %v452
    %v493 = vunpack.c.l.b16 %v453
    %v494 = vunpack.c.l.b16 %v454
    %v495 = vunpack.c.l.b16 %v455
    %v496 = vunpack.c.l.b16 %v456
    %v497 = vunpack.c.l.b16 %v457
    %v498 = vunpack.c.l.b16 %v458
    %v499 = vunpack.c.l.b16 %v459
    %v500 = vunpack.c.l.b16 %v460
    %v501 = vunpack.c.l.b16 %v461
    %v502 = vunpack.c.l.b16 %v462
    %v503 = vunpack.c.l.b16 %v463
    %v504 = vunpack.c.l.b16 %v464
    %v505 = vunpack.c.l.b16 %v465
    %v506 = vpack.c.b16 %v491, %v490
    %v507 = vpack.c.b16 %v493, %v492
    %v508 = vpack.c.b16 %v495, %v494
    %v509 = vpack.c.b16 %v497, %v496
    %v510 = vpack.c.b16 %v499, %v498
    %v511 = vpack.c.b16 %v501, %v500
    %v512 = vpack.c.b16 %v503, %v502
    %v513 = vpack.c.b16 %v505, %v504
    %522 = vmatprep.subr.bf16.mxu0 0
    %523 = vmatpush1.bf16.msra.mxu0 %v506
    %524 = vmatprep.subr.bf16.mxu0 0
    %525 = vmatpush1.bf16.msra.mxu0 %v507
    %526 = vmatprep.subr.bf16.mxu0 0
    %527 = vmatpush1.bf16.msra.mxu0 %v508
    %528 = vmatprep.subr.bf16.mxu0 0
    %529 = vmatpush1.bf16.msra.mxu0 %v509
    %530 = vmatprep.subr.bf16.mxu0 0
    %531 = vmatpush1.bf16.msra.mxu0 %v510
    %532 = vmatprep.subr.bf16.mxu0 0
    %533 = vmatpush1.bf16.msra.mxu0 %v511
    %534 = vmatprep.subr.bf16.mxu0 0
    %535 = vmatpush1.bf16.msra.mxu0 %v512
    %536 = vmatprep.subr.bf16.mxu0 0
    %537 = vmatpush1.bf16.msra.mxu0 %v513
    %538 = vmatprep.subr.bf16.mxu0 0
    %539 = vmatpush1.bf16.msra.mxu0 0
    %540 = vmatprep.subr.bf16.mxu0 0
    %541 = vmatpush1.bf16.msra.mxu0 0
    %542 = vmatprep.subr.bf16.mxu0 0
    %543 = vmatpush1.bf16.msra.mxu0 0
    %544 = vmatprep.subr.bf16.mxu0 0
    %545 = vmatpush1.bf16.msra.mxu0 0
    %546 = vmatprep.subr.bf16.mxu0 0
    %547 = vmatpush1.bf16.msra.mxu0 0
    %548 = vmatprep.subr.bf16.mxu0 0
    %549 = vmatpush1.bf16.msra.mxu0 0
    %550 = vmatprep.subr.bf16.mxu0 0
    %551 = vmatpush1.bf16.msra.mxu0 0
    %552 = vmatprep.subr.bf16.mxu0 0
    %553 = vmatpush1.bf16.msra.mxu0 0
    %554 = vmatprep.mubr.bf16.mxu0 0
    %555 = vmatmul.mubr.bf16.gmra.mrb[0].mxu0 %v445
    %v556 = vpop.f32.mrb[0].mxu0
    %v557 = vadd.f32 %v472, %v556
    %v558 = vpop.f32.mrb[0].mxu0
    %v559 = vpop.f32.mrb[0].mxu0
    %v560 = vadd.f32 %v472, %v559
    %v561 = vpop.f32.mrb[0].mxu0
    %562 = vmatprep.mubr.bf16.mxu0 0
    %563 = vmatmul.mubr.bf16.gmra.mrb[0].mxu0 %v446
    %v564 = vpop.f32.mrb[0].mxu0
    %v565 = vadd.f32 %v472, %v564
    %v566 = vpop.f32.mrb[0].mxu0
    %v567 = vpop.f32.mrb[0].mxu0
    %v568 = vadd.f32 %v472, %v567
    %v569 = vpop.f32.mrb[0].mxu0
    %570 = vmatprep.mubr.bf16.mxu0 0
    %571 = vmatmul.mubr.bf16.gmra.mrb[0].mxu0 %v447
    %v572 = vpop.f32.mrb[0].mxu0
    %v573 = vadd.f32 %v472, %v572
    %v574 = vpop.f32.mrb[0].mxu0
    %v575 = vpop.f32.mrb[0].mxu0
    %v576 = vadd.f32 %v472, %v575
    %v577 = vpop.f32.mrb[0].mxu0
    %578 = vmatprep.mubr.bf16.mxu0 0
    %579 = vmatmul.mubr.bf16.gmra.mrb[0].mxu0 %v448
    %v580 = vpop.f32.mrb[0].mxu0
    %v581 = vadd.f32 %v472, %v580
    %v582 = vpop.f32.mrb[0].mxu0
    %v583 = vpop.f32.mrb[0].mxu0
    %v584 = vadd.f32 %v472, %v583
    %v585 = vpop.f32.mrb[0].mxu0
    %586 = vdwg.mxu0
    %v587 = vmax.f32 %v557, 0.0
    %v588 = vmax.f32 %v560, 0.0
    %v589 = vmax.f32 %v565, 0.0
    %v590 = vmax.f32 %v568, 0.0
    %v591 = vmax.f32 %v573, 0.0
    %v592 = vmax.f32 %v576, 0.0
    %v593 = vmax.f32 %v581, 0.0
    %v594 = vmax.f32 %v584, 0.0
    %v595 = vpack.c.bf16 %v588, %v587
    %v596 = vpack.c.bf16 %v590, %v589
    %v597 = vpack.c.bf16 %v592, %v591
    %v598 = vpack.c.bf16 %v594, %v593
    %v599 = vld [vmem:[%s5] sm:$0xf]
    %v600 = vld [vmem:[%s5 + $0x4] sm:$0xf]
    %v601 = vld [vmem:[%s5 + $0x8] sm:$0xf]
    %v602 = vld [vmem:[%s5 + $0xc] sm:$0xf]
    %v603 = vld [vmem:[%s5 + $0x10] sm:$0xf]
    %v604 = vld [vmem:[%s5 + $0x14] sm:$0xf]
    %v605 = vld [vmem:[%s5 + $0x18] sm:$0xf]
    %v606 = vld [vmem:[%s5 + $0x1c] sm:$0xf]
    %v607 = vld [vmem:[%s5 + $0x20] sm:$0xf]
    %v608 = vld [vmem:[%s5 + $0x24] sm:$0xf]
    %v609 = vld [vmem:[%s5 + $0x28] sm:$0xf]
    %v610 = vld [vmem:[%s5 + $0x2c] sm:$0xf]
    %v611 = vld [vmem:[%s5 + $0x30] sm:$0xf]
    %v612 = vld [vmem:[%s5 + $0x34] sm:$0xf]
    %v613 = vld [vmem:[%s5 + $0x38] sm:$0xf]
    %v614 = vld [vmem:[%s5 + $0x3c] sm:$0xf]
    %v615 = vld [vmem:[%s6] sm:$0x1]
    %v617 = vlaneseq
    %v618 = vshrl.u32 %v617, 7
    %v619 = vsub.s32 0, %v618
    %v620 = vrot.slane %v615, %v619
    %v638 = vunpack.c.l.b16 %v599
    %v639 = vunpack.c.l.b16 %v600
    %v640 = vunpack.c.l.b16 %v601
    %v641 = vunpack.c.l.b16 %v602
    %v642 = vunpack.c.l.b16 %v603
    %v643 = vunpack.c.l.b16 %v604
    %v644 = vunpack.c.l.b16 %v605
    %v645 = vunpack.c.l.b16 %v606
    %v646 = vunpack.c.l.b16 %v607
    %v647 = vunpack.c.l.b16 %v608
    %v648 = vunpack.c.l.b16 %v609
    %v649 = vunpack.c.l.b16 %v610
    %v650 = vunpack.c.l.b16 %v611
    %v651 = vunpack.c.l.b16 %v612
    %v652 = vunpack.c.l.b16 %v613
    %v653 = vunpack.c.l.b16 %v614
    %v654 = vpack.c.b16 %v639, %v638
    %v655 = vpack.c.b16 %v641, %v640
    %v656 = vpack.c.b16 %v643, %v642
    %v657 = vpack.c.b16 %v645, %v644
    %v658 = vpack.c.b16 %v647, %v646
    %v659 = vpack.c.b16 %v649, %v648
    %v660 = vpack.c.b16 %v651, %v650
    %v661 = vpack.c.b16 %v653, %v652
    %670 = vmatprep.subr.bf16.mxu0 0
    %671 = vmatpush1.bf16.msra.mxu0 %v654
    %672 = vmatprep.subr.bf16.mxu0 0
    %673 = vmatpush1.bf16.msra.mxu0 %v655
    %674 = vmatprep.subr.bf16.mxu0 0
    %675 = vmatpush1.bf16.msra.mxu0 %v656
    %676 = vmatprep.subr.bf16.mxu0 0
    %677 = vmatpush1.bf16.msra.mxu0 %v657
    %678 = vmatprep.subr.bf16.mxu0 0
    %679 = vmatpush1.bf16.msra.mxu0 %v658
    %680 = vmatprep.subr.bf16.mxu0 0
    %681 = vmatpush1.bf16.msra.mxu0 %v659
    %682 = vmatprep.subr.bf16.mxu0 0
    %683 = vmatpush1.bf16.msra.mxu0 %v660
    %684 = vmatprep.subr.bf16.mxu0 0
    %685 = vmatpush1.bf16.msra.mxu0 %v661
    %686 = vmatprep.subr.bf16.mxu0 0
    %687 = vmatpush1.bf16.msra.mxu0 0
    %688 = vmatprep.subr.bf16.mxu0 0
    %689 = vmatpush1.bf16.msra.mxu0 0
    %690 = vmatprep.subr.bf16.mxu0 0
    %691 = vmatpush1.bf16.msra.mxu0 0
    %692 = vmatprep.subr.bf16.mxu0 0
    %693 = vmatpush1.bf16.msra.mxu0 0
    %694 = vmatprep.subr.bf16.mxu0 0
    %695 = vmatpush1.bf16.msra.mxu0 0
    %696 = vmatprep.subr.bf16.mxu0 0
    %697 = vmatpush1.bf16.msra.mxu0 0
    %698 = vmatprep.subr.bf16.mxu0 0
    %699 = vmatpush1.bf16.msra.mxu0 0
    %700 = vmatprep.subr.bf16.mxu0 0
    %701 = vmatpush1.bf16.msra.mxu0 0
    %702 = vmatprep.mubr.bf16.mxu0 0
    %703 = vmatmul.mubr.bf16.gmra.mrb[0].mxu0 %v595
    %v704 = vpop.f32.mrb[0].mxu0
    %v705 = vadd.f32 %v620, %v704
    %v706 = vpop.f32.mrb[0].mxu0
    %v707 = vpop.f32.mrb[0].mxu0
    %v708 = vadd.f32 %v620, %v707
    %v709 = vpop.f32.mrb[0].mxu0
    %710 = vmatprep.mubr.bf16.mxu0 0
    %711 = vmatmul.mubr.bf16.gmra.mrb[0].mxu0 %v596
    %v712 = vpop.f32.mrb[0].mxu0
    %v713 = vadd.f32 %v620, %v712
    %v714 = vpop.f32.mrb[0].mxu0
    %v715 = vpop.f32.mrb[0].mxu0
    %v716 = vadd.f32 %v620, %v715
    %v717 = vpop.f32.mrb[0].mxu0
    %718 = vmatprep.mubr.bf16.mxu0 0
    %719 = vmatmul.mubr.bf16.gmra.mrb[0].mxu0 %v597
    %v720 = vpop.f32.mrb[0].mxu0
    %v721 = vadd.f32 %v620, %v720
    %v722 = vpop.f32.mrb[0].mxu0
    %v723 = vpop.f32.mrb[0].mxu0
    %v724 = vadd.f32 %v620, %v723
    %v725 = vpop.f32.mrb[0].mxu0
    %726 = vmatprep.mubr.bf16.mxu0 0
    %727 = vmatmul.mubr.bf16.gmra.mrb[0].mxu0 %v598
    %v728 = vpop.f32.mrb[0].mxu0
    %v729 = vadd.f32 %v620, %v728
    %v730 = vpop.f32.mrb[0].mxu0
    %v731 = vpop.f32.mrb[0].mxu0
    %v732 = vadd.f32 %v620, %v731
    %v733 = vpop.f32.mrb[0].mxu0
    %734 = vdwg.mxu0
    %735 = vst [vmem:[#allocation5] sm:$0xff] %v705
    %736 = vst [vmem:[#allocation5 + $0x8] sm:$0xff] %v708
    %737 = vst [vmem:[#allocation5 + $0x10] sm:$0xff] %v713
    %738 = vst [vmem:[#allocation5 + $0x18] sm:$0xff] %v716
    %739 = vst [vmem:[#allocation5 + $0x20] sm:$0xff] %v721
    %740 = vst [vmem:[#allocation5 + $0x28] sm:$0xff] %v724
    %741 = vst [vmem:[#allocation5 + $0x30] sm:$0xff] %v729
    %742 = vst [vmem:[#allocation5 + $0x38] sm:$0xff] %v732
    // Predicated region
    $region34: #{tpu_custom_call.1} parent=1 // pred_check
      _
    $region35: #{tpu_custom_call.1} parent=1 // pred_check_branch
      %744 = sbr.rel (0) target = $region37
    $region36: #{tpu_custom_call.1} parent=1 // pred_region
      %s746 = ssub.s32 1024, 1024
      %747 = vsyncadd [#allocation4], %s746
      %s748 = sshll.u32 [#allocation5], 4
      %s749 = int_to_ptr.vmem [resolvable:$true] %s748
      %754 = dma.vmem_to_hbm [thread:$0]  %s749, 1024, %s7, [#allocation4], 128, 128, 8
    $region37: #{tpu_custom_call.1} parent=1 // pred_fallthru
      _
    // Predicated region
    $region38: #{tpu_custom_call.1} parent=1 // pred_check
      _
    $region39: #{tpu_custom_call.1} parent=1 // pred_check_branch
      %756 = sbr.rel (0) target = $region41
    $region40: #{tpu_custom_call.1} parent=1 // pred_region
      %757 = dma.done [#allocation4], 1024
    $region41: #{tpu_custom_call.1} parent=1 // pred_fallthru
      _
    %758 = vsyncpa [#allocation3], 1
    %759 = vsyncpa [#allocation4], 1

</llo_original>
